<compile_context>
chip_gen: v7x
topology: tpu7x:2x2x1
jax: 0.10.0
libtpu: 0.0.40
codegen_flags: <defaults>
</compile_context>

<pallas_src>
import jax
import jax.numpy as jnp
from jax import lax
from jax.experimental import pallas as pl
from jax.experimental.pallas import tpu as pltpu

EPS = 1e-12  # matches torch.nn.functional.normalize default eps


def _round_up(v, m):
    return (v + m - 1) // m * m


def _normalize_kernel(x_ref, o_ref):
    # Row-local math only: lane-axis reduce (XLU), rsqrt (EUP), broadcast mul (VPU).
    xf = x_ref[...].astype(jnp.float32)
    sq_sum = jnp.sum(xf * xf, axis=-1, keepdims=True)            # (TM, 1) f32
    # rsqrt(max(sq, eps^2)) == 1 / max(sqrt(sq), eps): sqrt is monotone and
    # eps^2 = 1e-24 is a normal f32.
    inv_norm = lax.rsqrt(jnp.maximum(sq_sum, EPS * EPS))          # (TM, 1) f32
    # Scale in f32 (no emulated bf16 VALU on v5e, single rounding), cast once.
    o_ref[...] = (xf * inv_norm).astype(o_ref.dtype)


def _tpu_generation():
    try:
        kind = jax.devices()[0].device_kind.lower()
    except Exception:
        return None
    for g in ("7", "6", "5", "4"):
        if g in kind:
            return g
    return None


def _arch_params():
    """(target block bytes, scoped-VMEM cap) per TPU generation."""
    gen = _tpu_generation()
    if gen in ("4", "5", "6"):
        # 128 MiB physical VMEM: bigger streaming blocks, generous scoped cap.
        return 4 << 20, 100 << 20
    # v7x (64 MiB VMEM per TC) or unknown: conservative.
    return 2 << 20, 48 << 20


def _sublane_pack(dtype):
    return {1: 32, 2: 16}.get(jnp.dtype(dtype).itemsize, 8)


def normalize(x, *, tile_rows=None):
    """L2-normalize `x` along axis 1 (x: (N, D)); matches F.normalize(x, p=2, dim=1)."""
    # TODO(synk): rank>2 inputs (dim=1 == channels) would need a transpose/reshape
    # wrapper; krakencoder feeds 2-D (batch, features) so only that path is handled.
    N, D = x.shape
    dtype_bytes = jnp.dtype(x.dtype).itemsize
    pack = _sublane_pack(x.dtype)
    target_block_bytes, vmem_cap = _arch_params()

    # Lane-dense stores: zero-pad ragged feature dims to a multiple of 128 (zeros
    # don't change the L2 norm); sliced back off after the call.
    D_pad = D if D % 128 == 0 else _round_up(D, 128)
    x_in = x if D_pad == D else jnp.pad(x, ((0, 0), (0, D_pad - D)))
    # TODO(synk): for D < 128 a row-packing layout would beat zero-padding.

    row_bytes = D_pad * dtype_bytes
    if tile_rows is None:
        rows = max(pack, min(8192, target_block_bytes // max(row_bytes, 1)))
        rows = max(pack, (rows // pack) * pack)
        # Keep >= 2 grid steps so the "parallel" axis can use both v7x TensorCores.
        if rows >= N and N > pack:
            rows = _round_up(-(-N // 2), pack)
        tile_rows = min(rows, _round_up(N, pack))
    tile_rows = max(pack, _round_up(int(tile_rows), pack))

    # No padding along N: Pallas masks the writes of the partial final block and
    # any garbage it reads stays row-local.
    grid = (pl.cdiv(N, tile_rows),)

    # Scoped-VMEM budget from the real per-step footprint: double-buffered in +
    # out blocks, plus the full-tile f32 temporary for sub-f32 inputs, + headroom.
    block_bytes = tile_rows * D_pad * dtype_bytes
    f32_temp = 0 if x.dtype == jnp.float32 else tile_rows * D_pad * 4
    needed = 4 * block_bytes + f32_temp + (2 << 20)
    vmem_limit = min(max(needed, 32 << 20), vmem_cap)

    out = pl.pallas_call(
        _normalize_kernel,
        out_shape=jax.ShapeDtypeStruct((N, D_pad), x.dtype),
        grid=grid,
        in_specs=[pl.BlockSpec((tile_rows, D_pad), lambda i: (i, 0))],
        out_specs=pl.BlockSpec((tile_rows, D_pad), lambda i: (i, 0)),
        compiler_params=pltpu.CompilerParams(
            dimension_semantics=("parallel",),
            vmem_limit_bytes=vmem_limit,
        ),
    )(x_in)

    return out if D_pad == D else out[:, :D]


def normalize_ref(x):
    # Pure-JAX reference mirroring torch.nn.functional.normalize(x, p=2, dim=1).
    xf = x.astype(jnp.float32)
    norm = jnp.maximum(jnp.sqrt(jnp.sum(xf * xf, axis=1, keepdims=True)), EPS)
    return (xf / norm).astype(x.dtype)


if __name__ == "__main__":
    key = jax.random.PRNGKey(0)
    k1, k2, k3, k4 = jax.random.split(key, 4)

    def check(x, atol, rtol):
        out = normalize(x)
        jax.block_until_ready(out)
        ref = normalize_ref(x)
        assert out.shape == x.shape and out.dtype == x.dtype
        assert bool(jnp.all(jnp.isfinite(out.astype(jnp.float32))))
        assert jnp.allclose(out.astype(jnp.float32), ref.astype(jnp.float32),
                            atol=atol, rtol=rtol), "mismatch vs reference"

    # Case 1: f32, batch not a multiple of the tile (masked partial final block).
    check(jax.random.normal(k1, (10, 256), dtype=jnp.float32), 1e-6, 1e-5)

    # Case 2: f32, includes a zero row (eps-clamp path).
    x2 = jax.random.normal(k2, (64, 128), dtype=jnp.float32).at[3].set(0.0)
    check(x2, 1e-6, 1e-5)

    # Case 3: bf16 path (16-row sublane pack, ragged batch, f32 temp budgeting).
    check(jax.random.normal(k3, (37, 384), dtype=jnp.bfloat16), 2e-2, 2e-2)

    # Case 4: ragged feature dim (lane-padding path, D=100 -> 128).
    check(jax.random.normal(k4, (16, 100), dtype=jnp.float32), 1e-6, 1e-5)

    print("KERNEL_OK")
</pallas_src>

<mosaic_0001>
module attributes {stable_mosaic.version = 11 : i64} {
  func.func @_normalize_kernel(%arg0: i32, %arg1: memref<8x256xf32, #tpu.memory_space<vmem>>, %arg2: memref<8x256xf32, #tpu.memory_space<vmem>>) attributes {dimension_semantics = [#tpu.dimension_semantics<parallel>], iteration_bounds = array<i64: 2>, scalar_prefetch = 0 : i64, scratch_operands = 0 : i64, tpu.core_type = #tpu.core_type<tc>, window_params = [{transform_indices = @transform_0, window_bounds = array<i64: 8, 256>}, {transform_indices = @transform_1, window_bounds = array<i64: 8, 256>}]} {
    %c0 = arith.constant 0 : index
    %c0_0 = arith.constant 0 : index
    %0 = vector.load %arg1[%c0, %c0_0] : memref<8x256xf32, #tpu.memory_space<vmem>>, vector<8x256xf32>
    %1 = arith.mulf %0, %0 : vector<8x256xf32>
    %cst = arith.constant dense<0.000000e+00> : vector<8xf32>
    %2 = vector.multi_reduction <add>, %1, %cst [1] : vector<8x256xf32> to vector<8xf32>
    %3 = vector.shape_cast %2 : vector<8xf32> to vector<8x1xf32>
    %cst_1 = arith.constant 1.000000e-24 : f32
    %4 = vector.broadcast %cst_1 : f32 to vector<8x1xf32>
    %5 = arith.maximumf %3, %4 : vector<8x1xf32>
    %6 = math.rsqrt %5 : vector<8x1xf32>
    %7 = vector.broadcast %6 : vector<8x1xf32> to vector<8x256xf32>
    %8 = arith.mulf %0, %7 : vector<8x256xf32>
    %c0_2 = arith.constant 0 : index
    %c0_3 = arith.constant 0 : index
    %9 = vector.load %arg2[%c0_2, %c0_3] : memref<8x256xf32, #tpu.memory_space<vmem>>, vector<8x256xf32>
    tpu.vector_store %arg2[%c0_2, %c0_3], %8 {strides = array<i32>} : memref<8x256xf32, #tpu.memory_space<vmem>>, vector<8x256xf32>,
    return
  }
  func.func @transform_0(%arg0: i32) -> (i32, i32) {
    %c0_i32 = arith.constant 0 : i32
    %c0_i32_0 = arith.constant 0 : i32
    return %arg0, %c0_i32 : i32, i32
  }
  func.func @transform_1(%arg0: i32) -> (i32, i32) {
    %c0_i32 = arith.constant 0 : i32
    %c0_i32_0 = arith.constant 0 : i32
    return %arg0, %c0_i32 : i32, i32
  }
}

</mosaic_0001>

<llo_original>
// kernel: tpu_custom_call.1
$region0: #{tpu_custom_call.1}
  #allocation0 [shape = 'u32[]', space=smem, size = 0x4, offset = 0x4, fixed_abs, tag = 'smem constant byte address 0x4 - core index']
  #allocation1 [shape = 'u32[144,128]{1,0:T(1,128)}', space=vmem, size = 0x12000, scoped, tag = 'internal scratch']
  %s0 = inlined_call_operand.hbm [shape: f32[10,256], index: 0, kind: input, shape index: {}]
  %s1 = inlined_call_operand.hbm [shape: f32[10,256], index: 1, kind: output, shape index: {}]
  %s2 = sld [smem:[#allocation0]]
  $region41: #{tpu_custom_call.1} parent=0
    _
  %s4 = ssub.s32 1, %s2
  %s5 = scalar_select 0, %s4, %s2
  $region1: #{tpu_custom_call.1} parent=0
    #allocation2 [shape = 'u8[16384]{0}', space=vmem, size = 0x4000, scoped, tag = 'input window, operand 0']
    #allocation3 [shape = 's32[2]{0}', space=sflag, size = 0x8, scoped, tag = 'scoped memory for tpu_custom_call.1']
    #allocation4 [shape = 's32[2]{0}', space=sflag, size = 0x8, scoped, tag = 'scoped memory for tpu_custom_call.1']
    #allocation5 [shape = 'u8[16384]{0}', space=vmem, size = 0x4000, scoped, tag = 'output window, operand 0']
    %6 = vsyncpa [#allocation3], 0
    %s7 = scalar_lea.sflag [#allocation3], 1
    %8 = vsyncpa %s7, 0
    %9 = vsyncpa [#allocation4], 0
    %s10 = scalar_lea.sflag [#allocation4], 1
    %11 = vsyncpa %s10, 0
    loop: start=0, step=1, limit=4
    $region2: #{tpu_custom_call.1} parent=1 // loop_pre_header
      _
    $region3: #{tpu_custom_call.1} parent=1 // loop_header
      %s13 = sphi 0, %s17
      %p14 = scmp.ge.s32.totalorder %s13, 4
      %s23 = sphi 0, %s25
      %s26 = sphi 0, %s23
      %s27 = sphi 0, %s26
      %s43 = sphi 0, %s27
      %s49 = sphi 0, %s51
      %s52 = sphi 0, %s49
      %s53 = sphi 0, %s52
      %s69 = sphi 0, %s53
    $region4: #{tpu_custom_call.1} parent=1 // loop_header_branch
      %16 = sbr.rel (%p14) target = $region8
    $region5: #{tpu_custom_call.1} parent=1 // loop_body
      %s18 = ssub.s32 %s13, 1
      %s19 = ssub.s32 %s13, 2
      %s20 = sadd.s32 %s13, 1
      %s21 = ssub.s32 %s13, %s20
      %p22 = scmp.eq.s32.totalorder %s21, 0
      %s24 = sadd.s32 %s23, 1
      %s25 = scalar_select %p22, %s23, %s24
      %p28 = pneg %p22
      %p29 = scmp.eq.s32.totalorder %s13, 1
      %p30 = por %p28, %p29
      %p31 = scmp.ne.s32.totalorder %s23, %s26
      %p32 = scmp.eq.s32.totalorder %s13, 0
      %p33 = por %p31, %p32
      %p34 = scmp.ne.s32.totalorder %s23, %s26
      %p35 = scmp.eq.s32.totalorder %s18, 1
      %p36 = por %p34, %p35
      %p37 = scmp.ne.s32.totalorder %s26, %s27
      %p38 = scmp.eq.s32.totalorder %s18, 0
      %p39 = por %p37, %p38
      %p40 = scmp.ne.s32.totalorder %s26, %s27
      %p41 = scmp.eq.s32.totalorder %s19, 1
      %p42 = por %p40, %p41
      %p44 = scmp.ne.s32.totalorder %s27, %s43
      %p45 = scmp.eq.s32.totalorder %s19, 0
      %p46 = por %p44, %p45
      %s47 = ssub.s32 %s13, %s20
      %p48 = scmp.eq.s32.totalorder %s47, 0
      %s50 = sadd.s32 %s49, 1
      %s51 = scalar_select %p48, %s49, %s50
      %p54 = pneg %p48
      %p55 = scmp.eq.s32.totalorder %s13, 1
      %p56 = por %p54, %p55
      %p57 = scmp.ne.s32.totalorder %s49, %s52
      %p58 = scmp.eq.s32.totalorder %s13, 0
      %p59 = por %p57, %p58
      %p60 = scmp.ne.s32.totalorder %s49, %s52
      %p61 = scmp.eq.s32.totalorder %s18, 1
      %p62 = por %p60, %p61
      %p63 = scmp.ne.s32.totalorder %s52, %s53
      %p64 = scmp.eq.s32.totalorder %s18, 0
      %p65 = por %p63, %p64
      %p66 = scmp.ne.s32.totalorder %s52, %s53
      %p67 = scmp.eq.s32.totalorder %s19, 1
      %p68 = por %p66, %p67
      %p70 = scmp.ne.s32.totalorder %s53, %s69
      %p71 = scmp.eq.s32.totalorder %s19, 0
      %p72 = por %p70, %p71
      %p73 = scmp.le.s32.totalorder 1, %s13
      %p74 = scmp.lt.s32.totalorder %s13, 3
      %p75 = pnand %p73, %p74
      %p76 = pneg %p75
      // Predicated region
      $region9: #{tpu_custom_call.1} parent=5 // pred_check
        _
      $region10: #{tpu_custom_call.1} parent=5 // pred_check_branch
        %78 = sbr.rel (%p75) target = $region12
      $region11: #{tpu_custom_call.1} parent=5 // pred_region
        %s79 = ssub.s32 %s13, 1
      $region12: #{tpu_custom_call.1} parent=5 // pred_fallthru
        _
      %p80 = scmp.lt.s32.totalorder %s13, 2
      // Predicated region
      $region13: #{tpu_custom_call.1} parent=5 // pred_check
        %p81 = pneg %p80
      $region14: #{tpu_custom_call.1} parent=5 // pred_check_branch
        %83 = sbr.rel (%p81) target = $region16
      $region15: #{tpu_custom_call.1} parent=5 // pred_region
        // Predicated region
        $region17: #{tpu_custom_call.1} parent=15 // pred_check
          %p84 = pneg %p33
        $region18: #{tpu_custom_call.1} parent=15 // pred_check_branch
          %86 = sbr.rel (%p84) target = $region20
        $region19: #{tpu_custom_call.1} parent=15 // pred_region
          %s87 = sand.u32 %s23, 1
          %s88 = scalar_lea.sflag [#allocation3], %s87
          %s89 = sand.u32 %s23, 1
          %s90 = smul.addr %s89, 16
          %s91 = scalar_lea.vmem [#allocation2], %s90
          %s93 = ssub.s32 256, 256
          %94 = vsyncadd %s88, %s93
          %s95 = smul.addr %s13, 2
          %s96 = smul.addr %s95, 128
          %s97 = scalar_lea.hbm %s0, %s96
          %s99 = sshll.u32 %s91, 4
          %s100 = int_to_ptr.vmem [resolvable:$true] %s99
          %102 = dma.hbm_to_vmem [thread:$0]  %s97, 256, %s100, %s88
        $region20: #{tpu_custom_call.1} parent=15 // pred_fallthru
          _
      $region16: #{tpu_custom_call.1} parent=5 // pred_fallthru
        _
      %p103 = scmp.le.s32.totalorder 1, %s13
      %p104 = scmp.lt.s32.totalorder %s13, 3
      %p105 = pnand %p103, %p104
      %p106 = pneg %p105
      // Predicated region
      $region21: #{tpu_custom_call.1} parent=5 // pred_check
        _
      $region22: #{tpu_custom_call.1} parent=5 // pred_check_branch
        %108 = sbr.rel (%p105) target = $region24
      $region23: #{tpu_custom_call.1} parent=5 // pred_region
        %s109 = ssub.s32 %s13, 1
        %s110 = sand.u32 %s26, 1
        %s111 = scalar_lea.sflag [#allocation3], %s110
        %s112 = sand.u32 %s26, 1
        %s113 = smul.addr %s112, 16
        %s114 = scalar_lea.vmem [#allocation2], %s113
        // Predicated region
        $region25: #{tpu_custom_call.1} parent=23 // pred_check
          %p115 = pneg %p39
        $region26: #{tpu_custom_call.1} parent=23 // pred_check_branch
          %117 = sbr.rel (%p115) target = $region28
        $region27: #{tpu_custom_call.1} parent=23 // pred_region
          %118 = dma.done %s111, 256
        $region28: #{tpu_custom_call.1} parent=23 // pred_fallthru
          _
        %s119 = sand.u32 %s26, 1
        %s120 = scalar_lea.sflag [#allocation3], %s119
        %s121 = sand.u32 %s26, 1
        %s122 = smul.addr %s121, 16
        %s123 = scalar_lea.vmem [#allocation2], %s122
        %p124 = pneg %p39
        %p125 = pneg %p36
        %p126 = pneg %p65
        %p127 = pneg %p62
        %s128 = sand.u32 %s52, 1
        %s129 = scalar_lea.sflag [#allocation4], %s128
        %s130 = sand.u32 %s52, 1
        %s131 = smul.addr %s130, 16
        %s132 = scalar_lea.vmem [#allocation5], %s131
        %v133 = vld [vmem:[%s114] sm:$0xff]
        %v134 = vld [vmem:[%s114 + $0x8] sm:$0xff]
        %v135 = vmul.f32 %v133, %v133
        %v136 = vmul.f32 %v134, %v134
        %v137 = vadd.f32 %v135, %v136
        %138 = vadd.xlane.f32.xlu0 %v137
        %v139 = vpop.xlane.xlu0 %138
        %v140 = vmax.f32 %v139, 1e-24
        %v141 = vrsqrt.pop %v140
        %v142 = vmul.f32 %v133, %v141
        %v143 = vmul.f32 %v134, %v141
        %144 = vst [vmem:[%s132] sm:$0xff] %v142
        %145 = vst [vmem:[%s132 + $0x8] sm:$0xff] %v143
        %s146 = sand.u32 %s52, 1
        %s147 = scalar_lea.sflag [#allocation4], %s146
        %s148 = sand.u32 %s52, 1
        %s149 = smul.addr %s148, 16
        %s150 = scalar_lea.vmem [#allocation5], %s149
        // Predicated region
        $region29: #{tpu_custom_call.1} parent=23 // pred_check
          %p151 = pneg %p62
        $region30: #{tpu_custom_call.1} parent=23 // pred_check_branch
          %153 = sbr.rel (%p151) target = $region32
        $region31: #{tpu_custom_call.1} parent=23 // pred_region
          %s155 = ssub.s32 256, 256
          %156 = vsyncadd %s147, %s155
          %s157 = smul.addr %s18, 2
          %s158 = smul.addr %s157, 128
          %s159 = scalar_lea.hbm %s1, %s158
          %s161 = sshll.u32 %s150, 4
          %s162 = int_to_ptr.vmem [resolvable:$true] %s161
          %164 = dma.vmem_to_hbm [thread:$0]  %s162, 256, %s159, %s147
        $region32: #{tpu_custom_call.1} parent=23 // pred_fallthru
          _
      $region24: #{tpu_custom_call.1} parent=5 // pred_fallthru
        _
      %p165 = scmp.le.s32.totalorder 2, %s13
      // Predicated region
      $region33: #{tpu_custom_call.1} parent=5 // pred_check
        %p166 = pneg %p165
      $region34: #{tpu_custom_call.1} parent=5 // pred_check_branch
        %168 = sbr.rel (%p166) target = $region36
      $region35: #{tpu_custom_call.1} parent=5 // pred_region
        %s169 = ssub.s32 %s13, 2
        // Predicated region
        $region37: #{tpu_custom_call.1} parent=35 // pred_check
          %p170 = pneg %p68
        $region38: #{tpu_custom_call.1} parent=35 // pred_check_branch
          %172 = sbr.rel (%p170) target = $region40
        $region39: #{tpu_custom_call.1} parent=35 // pred_region
          %s173 = sand.u32 %s53, 1
          %s174 = scalar_lea.sflag [#allocation4], %s173
          %s175 = sand.u32 %s53, 1
          %s176 = smul.addr %s175, 16
          %s177 = scalar_lea.vmem [#allocation5], %s176
          %178 = dma.done %s174, 256
        $region40: #{tpu_custom_call.1} parent=35 // pred_fallthru
          _
      $region36: #{tpu_custom_call.1} parent=5 // pred_fallthru
        _
    $region6: #{tpu_custom_call.1} parent=1 // loop_footer
      %s17 = sadd.s32 1, %s13
    $region7: #{tpu_custom_call.1} parent=1 // loop_footer_branch
      %12 = sbr.rel target = $region3
    $region8: #{tpu_custom_call.1} parent=1 // loop_exit
      _
    %179 = vsyncpa [#allocation3], 1
    %s180 = scalar_lea.sflag [#allocation3], 1
    %181 = vsyncpa %s180, 1
    %182 = vsyncpa [#allocation4], 1
    %s183 = scalar_lea.sflag [#allocation4], 1
    %184 = vsyncpa %s183, 1

</llo_original>
